<compile_context>
chip_gen: v7x
topology: tpu7x:2x2x1
jax: 0.10.0
libtpu: 0.0.40
codegen_flags: <defaults>
</compile_context>

<pallas_src>
import jax
import jax.numpy as jnp
from jax.experimental import pallas as pl
from jax.experimental.pallas import tpu as pltpu


def _fused_conv1x1_kernel(x_ref, w_ref, b_ref, o_ref):
    # x_ref: (C_in, TS)    unpadded interior pixels, spatial flattened in lanes
    # w_ref: (C_out, C_in) pre-scaled 1x1 conv weights  (0.5 * W)
    # b_ref: (C_out, 1)    pre-folded bias              (0.5 * b + 4.5)
    # o_ref: (C_out, TS)   lane-dense output tile
    y = jnp.dot(w_ref[...], x_ref[...], preferred_element_type=jnp.float32)
    o_ref[...] = jnp.maximum(y + b_ref[...], 0.0)


def fused_model_forward(x_nchw, weight, bias):
    """x_nchw: (N, C_in, H, W) float32
       weight: (C_out, C_in)   float32 (1x1 conv kernel, squeezed)
       bias:   (C_out,)        float32
       returns (N, C_out, H+2, W+2) float32 == 0.5*relu(conv_pad1(x) + 9)."""
    N, C_in, H, W = x_nchw.shape
    C_out = weight.shape[0]
    Hp, Wp = H + 2, W + 2
    S = H * W  # unpadded interior only -> 4096 here, lane-aligned

    # Fold the graph's +9 / *0.5 epilogue into the (8,3)/(8,) params (exact,
    # since the scale is positive).  Wrapper-side cost is negligible.
    w_mat = (0.5 * weight).astype(jnp.float32)                    # (C_out, C_in)
    b_mat = (0.5 * bias + 4.5).astype(jnp.float32).reshape(C_out, 1)

    x_flat = x_nchw.astype(jnp.float32).reshape(N, C_in, S)

    # Single step at this size; only tile once the spatial extent is large
    # enough that per-tile DMA time clearly exceeds the ~0.35us step cost.
    TS = S if S <= 32768 else 16384          # 16384 is a multiple of 128
    grid = (N, pl.cdiv(S, TS))

    cost = pl.CostEstimate(
        flops=2 * N * S * C_in * C_out,
        transcendentals=0,
        bytes_accessed=4 * (N * S * (C_in + C_out) + C_in * C_out + C_out),
    )

    interior = pl.pallas_call(
        _fused_conv1x1_kernel,
        out_shape=jax.ShapeDtypeStruct((N, C_out, S), jnp.float32),
        grid=grid,
        in_specs=[
            pl.BlockSpec((pl.Squeezed(), C_in, TS), lambda n, s: (n, 0, s)),
            pl.BlockSpec((C_out, C_in), lambda n, s: (0, 0)),
            pl.BlockSpec((C_out, 1), lambda n, s: (0, 0)),
        ],
        out_specs=pl.BlockSpec((pl.Squeezed(), C_out, TS),
                               lambda n, s: (n, 0, s)),
        compiler_params=pltpu.CompilerParams(
            dimension_semantics=("parallel", "parallel")),
        cost_estimate=cost,
    )(x_flat, w_mat, b_mat)

    interior = interior.reshape(N, C_out, H, W)

    # 1x1 conv + zero padding => border outputs are a per-channel constant:
    # 0.5*relu(0 + b + 9) == relu(0.5*b + 4.5) == relu(b_mat).
    border = jnp.maximum(b_mat, 0.0).reshape(1, C_out, 1, 1)
    out = jnp.broadcast_to(border, (N, C_out, Hp, Wp))
    out = jax.lax.dynamic_update_slice(out, interior, (0, 0, 1, 1))
    return out


if __name__ == "__main__":
    key = jax.random.PRNGKey(0)
    kx, kw, kb = jax.random.split(key, 3)

    # Shapes from the original module: x1 = randn(1, 3, 64, 64), Conv2d(3->8, k=1, pad=1)
    N, C_in, H, W = 1, 3, 64, 64
    C_out = 8

    x = jax.random.normal(kx, (N, C_in, H, W), dtype=jnp.float32)
    weight = 0.1 * jax.random.normal(kw, (C_out, C_in), dtype=jnp.float32)
    bias = 0.1 * jax.random.normal(kb, (C_out,), dtype=jnp.float32)

    forward = jax.jit(fused_model_forward)
    out = forward(x, weight, bias)
    jax.block_until_ready(out)

    # pure-JAX reference following the original graph literally
    x_pad = jnp.pad(x, ((0, 0), (0, 0), (1, 1), (1, 1)))
    conv = jnp.einsum("oc,nchw->nohw", weight, x_pad) + bias[None, :, None, None]
    v2 = conv + 3.0
    r = jnp.maximum(v2 + 6.0, 0.0)       # v11 .. v25 are all identical
    v29 = r + r                          # v25 + v15
    v30 = v29 + r                        # + v23
    ref = v30 / 6.0                      # v31

    assert out.shape == (N, C_out, H + 2, W + 2)
    assert jnp.allclose(out, ref, atol=1e-5, rtol=1e-5)

    print("KERNEL_OK")
</pallas_src>

<mosaic_0001>
module attributes {stable_mosaic.version = 11 : i64} {
  func.func @_fused_conv1x1_kernel(%arg0: i32, %arg1: i32, %arg2: memref<1x3x4096xf32, #tpu.memory_space<vmem>>, %arg3: memref<8x3xf32, #tpu.memory_space<vmem>>, %arg4: memref<8x1xf32, #tpu.memory_space<vmem>>, %arg5: memref<1x8x4096xf32, #tpu.memory_space<vmem>>) attributes {dimension_semantics = [#tpu.dimension_semantics<parallel>, #tpu.dimension_semantics<parallel>], iteration_bounds = array<i64: 1, 1>, scalar_prefetch = 0 : i64, scratch_operands = 0 : i64, tpu.core_type = #tpu.core_type<tc>, window_params = [{transform_indices = @transform_0, window_bounds = array<i64: 1, 3, 4096>}, {pipeline_mode = #tpu.pipeline_mode<synchronous>, transform_indices = @transform_1, window_bounds = array<i64: 8, 3>}, {pipeline_mode = #tpu.pipeline_mode<synchronous>, transform_indices = @transform_2, window_bounds = array<i64: 8, 1>}, {transform_indices = @transform_3, window_bounds = array<i64: 1, 8, 4096>}]} {
    %c0 = arith.constant 0 : index
    %c0_0 = arith.constant 0 : index
    %0 = vector.load %arg3[%c0, %c0_0] : memref<8x3xf32, #tpu.memory_space<vmem>>, vector<8x3xf32>
    %c0_1 = arith.constant 0 : index
    %c0_2 = arith.constant 0 : index
    %c0_3 = arith.constant 0 : index
    %1 = vector.load %arg2[%c0_1, %c0_2, %c0_3] : memref<1x3x4096xf32, #tpu.memory_space<vmem>>, vector<1x3x4096xf32>
    %2 = vector.shape_cast %1 : vector<1x3x4096xf32> to vector<3x4096xf32>
    %cst = arith.constant dense<0.000000e+00> : vector<8x4096xf32>
    %3 = tpu.matmul %0, %2, %cst {dimension_numbers = #tpu.dot_dimension_numbers<[1], [0], [0], [1], [0, 0, 1, 1], [], []>} : vector<8x3xf32>, vector<3x4096xf32>, vector<8x4096xf32> -> vector<8x4096xf32>
    %c0_4 = arith.constant 0 : index
    %c0_5 = arith.constant 0 : index
    %4 = vector.load %arg4[%c0_4, %c0_5] : memref<8x1xf32, #tpu.memory_space<vmem>>, vector<8x1xf32>
    %5 = vector.broadcast %4 : vector<8x1xf32> to vector<8x4096xf32>
    %6 = arith.addf %3, %5 : vector<8x4096xf32>
    %cst_6 = arith.constant 0.000000e+00 : f32
    %7 = vector.broadcast %cst_6 : f32 to vector<8x4096xf32>
    %8 = arith.maximumf %6, %7 : vector<8x4096xf32>
    %c0_7 = arith.constant 0 : index
    %c0_8 = arith.constant 0 : index
    %c0_9 = arith.constant 0 : index
    %9 = vector.load %arg5[%c0_7, %c0_8, %c0_9] : memref<1x8x4096xf32, #tpu.memory_space<vmem>>, vector<1x8x4096xf32>
    %10 = vector.shape_cast %9 : vector<1x8x4096xf32> to vector<8x4096xf32>
    %11 = vector.shape_cast %8 : vector<8x4096xf32> to vector<1x8x4096xf32>
    tpu.vector_store %arg5[%c0_7, %c0_8, %c0_9], %11 {strides = array<i32>} : memref<1x8x4096xf32, #tpu.memory_space<vmem>>, vector<1x8x4096xf32>,
    return
  }
  func.func @transform_0(%arg0: i32, %arg1: i32) -> (i32, i32, i32) {
    %c0_i32 = arith.constant 0 : i32
    %c0_i32_0 = arith.constant 0 : i32
    return %arg0, %c0_i32, %arg1 : i32, i32, i32
  }
  func.func @transform_1(%arg0: i32, %arg1: i32) -> (i32, i32) {
    %c0_i32 = arith.constant 0 : i32
    %c0_i32_0 = arith.constant 0 : i32
    %c0_i32_1 = arith.constant 0 : i32
    return %c0_i32, %c0_i32_0 : i32, i32
  }
  func.func @transform_2(%arg0: i32, %arg1: i32) -> (i32, i32) {
    %c0_i32 = arith.constant 0 : i32
    %c0_i32_0 = arith.constant 0 : i32
    %c0_i32_1 = arith.constant 0 : i32
    return %c0_i32, %c0_i32_0 : i32, i32
  }
  func.func @transform_3(%arg0: i32, %arg1: i32) -> (i32, i32, i32) {
    %c0_i32 = arith.constant 0 : i32
    %c0_i32_0 = arith.constant 0 : i32
    return %arg0, %c0_i32, %arg1 : i32, i32, i32
  }
}

</mosaic_0001>

<llo_original>
// kernel: fused_model_forward.1
$region0: #{fused_model_forward.1}
  #allocation0 [shape = 'u32[]', space=smem, size = 0x4, offset = 0x4, fixed_abs, tag = 'smem constant byte address 0x4 - core index']
  #allocation1 [shape = 'u32[144,128]{1,0:T(1,128)}', space=vmem, size = 0x12000, scoped, tag = 'internal scratch']
  %s0 = inlined_call_operand.vmem [shape: f32[1,3,4096], index: 0, kind: input, shape index: {}]
  %s1 = inlined_call_operand.vmem [shape: f32[8,3], index: 1, kind: input, shape index: {}]
  %s2 = inlined_call_operand.vmem [shape: f32[8,1], index: 2, kind: input, shape index: {}]
  %s3 = inlined_call_operand.vmem [shape: f32[1,8,4096], index: 3, kind: output, shape index: {}]
  %s4 = sld [smem:[#allocation0]]
  $region22: #{fused_model_forward.1} parent=0
    _
  %s6 = ssub.s32 1, %s4
  %s7 = scalar_select 0, %s6, %s4
  // Predicated region
  $region2: #{fused_model_forward.1} parent=0 // pred_check
    _
  $region3: #{fused_model_forward.1} parent=0 // pred_check_branch
    %9 = sbr.rel (0) target = $region5
  $region4: #{fused_model_forward.1} parent=0 // pred_region
    _
  $region5: #{fused_model_forward.1} parent=0 // pred_fallthru
    _
  // Predicated region
  $region6: #{fused_model_forward.1} parent=0 // pred_check
    _
  $region7: #{fused_model_forward.1} parent=0 // pred_check_branch
    %11 = sbr.rel (0) target = $region9
  $region8: #{fused_model_forward.1} parent=0 // pred_region
    _
  $region9: #{fused_model_forward.1} parent=0 // pred_fallthru
    _
  // Predicated region
  $region10: #{fused_model_forward.1} parent=0 // pred_check
    _
  $region11: #{fused_model_forward.1} parent=0 // pred_check_branch
    %13 = sbr.rel (0) target = $region13
  $region12: #{fused_model_forward.1} parent=0 // pred_region
    _
  $region13: #{fused_model_forward.1} parent=0 // pred_fallthru
    _
  %v14 = vld [vmem:[%s1] sm:$0xff]
  %v15 = vld [vmem:[%s0] sm:$0x77]
  %v16 = vld [vmem:[%s0 + $0x8] sm:$0x77]
  %v17 = vld [vmem:[%s0 + $0x10] sm:$0x77]
  %v18 = vld [vmem:[%s0 + $0x18] sm:$0x77]
  %v19 = vld [vmem:[%s0 + $0x20] sm:$0x77]
  %v20 = vld [vmem:[%s0 + $0x28] sm:$0x77]
  %v21 = vld [vmem:[%s0 + $0x30] sm:$0x77]
  %v22 = vld [vmem:[%s0 + $0x38] sm:$0x77]
  %v23 = vld [vmem:[%s0 + $0x40] sm:$0x77]
  %v24 = vld [vmem:[%s0 + $0x48] sm:$0x77]
  %v25 = vld [vmem:[%s0 + $0x50] sm:$0x77]
  %v26 = vld [vmem:[%s0 + $0x58] sm:$0x77]
  %v27 = vld [vmem:[%s0 + $0x60] sm:$0x77]
  %v28 = vld [vmem:[%s0 + $0x68] sm:$0x77]
  %v29 = vld [vmem:[%s0 + $0x70] sm:$0x77]
  %v30 = vld [vmem:[%s0 + $0x78] sm:$0x77]
  %v31 = vld [vmem:[%s2] sm:$0xff]
  %33 = vset.pattern.permute.xlu0 0
  %34 = vperm.xlu0 %33, %v31
  %v35 = vpop.permute.xlu0 %34
  %v53 = vcombine.high %v15, %v15
  %v54 = vcombine.high %v16, %v16
  %v55 = vcombine.high %v17, %v17
  %v56 = vcombine.high %v18, %v18
  %v57 = vcombine.high %v19, %v19
  %v58 = vcombine.high %v20, %v20
  %v59 = vcombine.high %v21, %v21
  %v60 = vcombine.high %v22, %v22
  %v61 = vcombine.high %v23, %v23
  %v62 = vcombine.high %v24, %v24
  %v63 = vcombine.high %v25, %v25
  %v64 = vcombine.high %v26, %v26
  %v65 = vcombine.high %v27, %v27
  %v66 = vcombine.high %v28, %v28
  %v67 = vcombine.high %v29, %v29
  %v68 = vcombine.high %v30, %v30
  %vm69 = vcmask 23552
  %v71 = vsel %vm69, %v14, 0
  %vm73 = vcmask 1042432
  %v74 = vsel %vm73, %v15, 0
  %v76 = vsel %vm73, %v53, 0
  %v78 = vsel %vm73, %v16, 0
  %v80 = vsel %vm73, %v54, 0
  %v82 = vsel %vm73, %v17, 0
  %v84 = vsel %vm73, %v55, 0
  %v86 = vsel %vm73, %v18, 0
  %v88 = vsel %vm73, %v56, 0
  %v90 = vsel %vm73, %v19, 0
  %v92 = vsel %vm73, %v57, 0
  %v94 = vsel %vm73, %v20, 0
  %v96 = vsel %vm73, %v58, 0
  %v98 = vsel %vm73, %v21, 0
  %v100 = vsel %vm73, %v59, 0
  %v102 = vsel %vm73, %v22, 0
  %v104 = vsel %vm73, %v60, 0
  %v106 = vsel %vm73, %v23, 0
  %v108 = vsel %vm73, %v61, 0
  %v110 = vsel %vm73, %v24, 0
  %v112 = vsel %vm73, %v62, 0
  %v114 = vsel %vm73, %v25, 0
  %v116 = vsel %vm73, %v63, 0
  %v118 = vsel %vm73, %v26, 0
  %v120 = vsel %vm73, %v64, 0
  %v122 = vsel %vm73, %v27, 0
  %v124 = vsel %vm73, %v65, 0
  %v126 = vsel %vm73, %v28, 0
  %v128 = vsel %vm73, %v66, 0
  %v130 = vsel %vm73, %v29, 0
  %v132 = vsel %vm73, %v67, 0
  %v134 = vsel %vm73, %v30, 0
  %v136 = vsel %vm73, %v68, 0
  %138 = vmatprep.subr.mxu0 %v76
  %139 = vmatpush1.msra.mxu0 %v74
  %140 = vmatprep.subr.mxu0 0.0
  %141 = vmatpush1.msra.mxu0 0.0
  %142 = vmatprep.subr.mxu0 0.0
  %143 = vmatpush1.msra.mxu0 0.0
  %144 = vmatprep.subr.mxu0 0.0
  %145 = vmatpush1.msra.mxu0 0.0
  %146 = vmatprep.subr.mxu0 0.0
  %147 = vmatpush1.msra.mxu0 0.0
  %148 = vmatprep.subr.mxu0 0.0
  %149 = vmatpush1.msra.mxu0 0.0
  %150 = vmatprep.subr.mxu0 0.0
  %151 = vmatpush1.msra.mxu0 0.0
  %152 = vmatprep.subr.mxu0 0.0
  %153 = vmatpush1.msra.mxu0 0.0
  %154 = vmatprep.subr.mxu0 0.0
  %155 = vmatpush1.msra.mxu0 0.0
  %156 = vmatprep.subr.mxu0 0.0
  %157 = vmatpush1.msra.mxu0 0.0
  %158 = vmatprep.subr.mxu0 0.0
  %159 = vmatpush1.msra.mxu0 0.0
  %160 = vmatprep.subr.mxu0 0.0
  %161 = vmatpush1.msra.mxu0 0.0
  %162 = vmatprep.subr.mxu0 0.0
  %163 = vmatpush1.msra.mxu0 0.0
  %164 = vmatprep.subr.mxu0 0.0
  %165 = vmatpush1.msra.mxu0 0.0
  %166 = vmatprep.subr.mxu0 0.0
  %167 = vmatpush1.msra.mxu0 0.0
  %168 = vmatprep.subr.mxu0 0.0
  %169 = vmatpush1.msra.mxu0 0.0
  %170 = vmatprep.subr.mxu0 0.0
  %171 = vmatpush1.msra.mxu0 0.0
  %172 = vmatprep.subr.mxu0 0.0
  %173 = vmatpush1.msra.mxu0 0.0
  %174 = vmatprep.subr.mxu0 0.0
  %175 = vmatpush1.msra.mxu0 0.0
  %176 = vmatprep.subr.mxu0 0.0
  %177 = vmatpush1.msra.mxu0 0.0
  %178 = vmatprep.subr.mxu0 0.0
  %179 = vmatpush1.msra.mxu0 0.0
  %180 = vmatprep.subr.mxu0 0.0
  %181 = vmatpush1.msra.mxu0 0.0
  %182 = vmatprep.subr.mxu0 0.0
  %183 = vmatpush1.msra.mxu0 0.0
  %184 = vmatprep.subr.mxu0 0.0
  %185 = vmatpush1.msra.mxu0 0.0
  %186 = vmatprep.subr.mxu0 0.0
  %187 = vmatpush1.msra.mxu0 0.0
  %188 = vmatprep.subr.mxu0 0.0
  %189 = vmatpush1.msra.mxu0 0.0
  %190 = vmatprep.subr.mxu0 0.0
  %191 = vmatpush1.msra.mxu0 0.0
  %192 = vmatprep.subr.mxu0 0.0
  %193 = vmatpush1.msra.mxu0 0.0
  %194 = vmatprep.subr.mxu0 0.0
  %195 = vmatpush1.msra.mxu0 0.0
  %196 = vmatprep.subr.mxu0 0.0
  %197 = vmatpush1.msra.mxu0 0.0
  %198 = vmatprep.subr.mxu0 0.0
  %199 = vmatpush1.msra.mxu0 0.0
  %200 = vmatprep.subr.mxu0 0.0
  %201 = vmatpush1.msra.mxu0 0.0
  %202 = vmatprep.mubr.f32.mxu0 0.0
  %203 = vmatmul.mubr.f32.gmra.mrb[0].mxu0 %v71
  %v204 = vpop.f32.mrb[0].mxu0
  %v205 = vadd.f32 %v35, %v204
  %v206 = vpop.f32.mrb[0].mxu0
  %v207 = vadd.f32 %v35, %v206
  %208 = vdwg.mxu0
  %209 = vmatprep.subr.mxu0 %v80
  %210 = vmatpush1.msra.mxu0 %v78
  %211 = vmatprep.subr.mxu0 0.0
  %212 = vmatpush1.msra.mxu0 0.0
  %213 = vmatprep.subr.mxu0 0.0
  %214 = vmatpush1.msra.mxu0 0.0
  %215 = vmatprep.subr.mxu0 0.0
  %216 = vmatpush1.msra.mxu0 0.0
  %217 = vmatprep.subr.mxu0 0.0
  %218 = vmatpush1.msra.mxu0 0.0
  %219 = vmatprep.subr.mxu0 0.0
  %220 = vmatpush1.msra.mxu0 0.0
  %221 = vmatprep.subr.mxu0 0.0
  %222 = vmatpush1.msra.mxu0 0.0
  %223 = vmatprep.subr.mxu0 0.0
  %224 = vmatpush1.msra.mxu0 0.0
  %225 = vmatprep.subr.mxu0 0.0
  %226 = vmatpush1.msra.mxu0 0.0
  %227 = vmatprep.subr.mxu0 0.0
  %228 = vmatpush1.msra.mxu0 0.0
  %229 = vmatprep.subr.mxu0 0.0
  %230 = vmatpush1.msra.mxu0 0.0
  %231 = vmatprep.subr.mxu0 0.0
  %232 = vmatpush1.msra.mxu0 0.0
  %233 = vmatprep.subr.mxu0 0.0
  %234 = vmatpush1.msra.mxu0 0.0
  %235 = vmatprep.subr.mxu0 0.0
  %236 = vmatpush1.msra.mxu0 0.0
  %237 = vmatprep.subr.mxu0 0.0
  %238 = vmatpush1.msra.mxu0 0.0
  %239 = vmatprep.subr.mxu0 0.0
  %240 = vmatpush1.msra.mxu0 0.0
  %241 = vmatprep.subr.mxu0 0.0
  %242 = vmatpush1.msra.mxu0 0.0
  %243 = vmatprep.subr.mxu0 0.0
  %244 = vmatpush1.msra.mxu0 0.0
  %245 = vmatprep.subr.mxu0 0.0
  %246 = vmatpush1.msra.mxu0 0.0
  %247 = vmatprep.subr.mxu0 0.0
  %248 = vmatpush1.msra.mxu0 0.0
  %249 = vmatprep.subr.mxu0 0.0
  %250 = vmatpush1.msra.mxu0 0.0
  %251 = vmatprep.subr.mxu0 0.0
  %252 = vmatpush1.msra.mxu0 0.0
  %253 = vmatprep.subr.mxu0 0.0
  %254 = vmatpush1.msra.mxu0 0.0
  %255 = vmatprep.subr.mxu0 0.0
  %256 = vmatpush1.msra.mxu0 0.0
  %257 = vmatprep.subr.mxu0 0.0
  %258 = vmatpush1.msra.mxu0 0.0
  %259 = vmatprep.subr.mxu0 0.0
  %260 = vmatpush1.msra.mxu0 0.0
  %261 = vmatprep.subr.mxu0 0.0
  %262 = vmatpush1.msra.mxu0 0.0
  %263 = vmatprep.subr.mxu0 0.0
  %264 = vmatpush1.msra.mxu0 0.0
  %265 = vmatprep.subr.mxu0 0.0
  %266 = vmatpush1.msra.mxu0 0.0
  %267 = vmatprep.subr.mxu0 0.0
  %268 = vmatpush1.msra.mxu0 0.0
  %269 = vmatprep.subr.mxu0 0.0
  %270 = vmatpush1.msra.mxu0 0.0
  %271 = vmatprep.subr.mxu0 0.0
  %272 = vmatpush1.msra.mxu0 0.0
  %273 = vmatprep.mubr.f32.mxu0 0.0
  %274 = vmatmul.mubr.f32.gmra.mrb[0].mxu0 %v71
  %v275 = vpop.f32.mrb[0].mxu0
  %v276 = vadd.f32 %v35, %v275
  %v277 = vpop.f32.mrb[0].mxu0
  %v278 = vadd.f32 %v35, %v277
  %279 = vdwg.mxu0
  %280 = vmatprep.subr.mxu0 %v84
  %281 = vmatpush1.msra.mxu0 %v82
  %282 = vmatprep.subr.mxu0 0.0
  %283 = vmatpush1.msra.mxu0 0.0
  %284 = vmatprep.subr.mxu0 0.0
  %285 = vmatpush1.msra.mxu0 0.0
  %286 = vmatprep.subr.mxu0 0.0
  %287 = vmatpush1.msra.mxu0 0.0
  %288 = vmatprep.subr.mxu0 0.0
  %289 = vmatpush1.msra.mxu0 0.0
  %290 = vmatprep.subr.mxu0 0.0
  %291 = vmatpush1.msra.mxu0 0.0
  %292 = vmatprep.subr.mxu0 0.0
  %293 = vmatpush1.msra.mxu0 0.0
  %294 = vmatprep.subr.mxu0 0.0
  %295 = vmatpush1.msra.mxu0 0.0
  %296 = vmatprep.subr.mxu0 0.0
  %297 = vmatpush1.msra.mxu0 0.0
  %298 = vmatprep.subr.mxu0 0.0
  %299 = vmatpush1.msra.mxu0 0.0
  %300 = vmatprep.subr.mxu0 0.0
  %301 = vmatpush1.msra.mxu0 0.0
  %302 = vmatprep.subr.mxu0 0.0
  %303 = vmatpush1.msra.mxu0 0.0
  %304 = vmatprep.subr.mxu0 0.0
  %305 = vmatpush1.msra.mxu0 0.0
  %306 = vmatprep.subr.mxu0 0.0
  %307 = vmatpush1.msra.mxu0 0.0
  %308 = vmatprep.subr.mxu0 0.0
  %309 = vmatpush1.msra.mxu0 0.0
  %310 = vmatprep.subr.mxu0 0.0
  %311 = vmatpush1.msra.mxu0 0.0
  %312 = vmatprep.subr.mxu0 0.0
  %313 = vmatpush1.msra.mxu0 0.0
  %314 = vmatprep.subr.mxu0 0.0
  %315 = vmatpush1.msra.mxu0 0.0
  %316 = vmatprep.subr.mxu0 0.0
  %317 = vmatpush1.msra.mxu0 0.0
  %318 = vmatprep.subr.mxu0 0.0
  %319 = vmatpush1.msra.mxu0 0.0
  %320 = vmatprep.subr.mxu0 0.0
  %321 = vmatpush1.msra.mxu0 0.0
  %322 = vmatprep.subr.mxu0 0.0
  %323 = vmatpush1.msra.mxu0 0.0
  %324 = vmatprep.subr.mxu0 0.0
  %325 = vmatpush1.msra.mxu0 0.0
  %326 = vmatprep.subr.mxu0 0.0
  %327 = vmatpush1.msra.mxu0 0.0
  %328 = vmatprep.subr.mxu0 0.0
  %329 = vmatpush1.msra.mxu0 0.0
  %330 = vmatprep.subr.mxu0 0.0
  %331 = vmatpush1.msra.mxu0 0.0
  %332 = vmatprep.subr.mxu0 0.0
  %333 = vmatpush1.msra.mxu0 0.0
  %334 = vmatprep.subr.mxu0 0.0
  %335 = vmatpush1.msra.mxu0 0.0
  %336 = vmatprep.subr.mxu0 0.0
  %337 = vmatpush1.msra.mxu0 0.0
  %338 = vmatprep.subr.mxu0 0.0
  %339 = vmatpush1.msra.mxu0 0.0
  %340 = vmatprep.subr.mxu0 0.0
  %341 = vmatpush1.msra.mxu0 0.0
  %342 = vmatprep.subr.mxu0 0.0
  %343 = vmatpush1.msra.mxu0 0.0
  %344 = vmatprep.mubr.f32.mxu0 0.0
  %345 = vmatmul.mubr.f32.gmra.mrb[0].mxu0 %v71
  %v346 = vpop.f32.mrb[0].mxu0
  %v347 = vadd.f32 %v35, %v346
  %v348 = vpop.f32.mrb[0].mxu0
  %v349 = vadd.f32 %v35, %v348
  %350 = vdwg.mxu0
  %351 = vmatprep.subr.mxu0 %v88
  %352 = vmatpush1.msra.mxu0 %v86
  %353 = vmatprep.subr.mxu0 0.0
  %354 = vmatpush1.msra.mxu0 0.0
  %355 = vmatprep.subr.mxu0 0.0
  %356 = vmatpush1.msra.mxu0 0.0
  %357 = vmatprep.subr.mxu0 0.0
  %358 = vmatpush1.msra.mxu0 0.0
  %359 = vmatprep.subr.mxu0 0.0
  %360 = vmatpush1.msra.mxu0 0.0
  %361 = vmatprep.subr.mxu0 0.0
  %362 = vmatpush1.msra.mxu0 0.0
  %363 = vmatprep.subr.mxu0 0.0
  %364 = vmatpush1.msra.mxu0 0.0
  %365 = vmatprep.subr.mxu0 0.0
  %366 = vmatpush1.msra.mxu0 0.0
  %367 = vmatprep.subr.mxu0 0.0
  %368 = vmatpush1.msra.mxu0 0.0
  %369 = vmatprep.subr.mxu0 0.0
  %370 = vmatpush1.msra.mxu0 0.0
  %371 = vmatprep.subr.mxu0 0.0
  %372 = vmatpush1.msra.mxu0 0.0
  %373 = vmatprep.subr.mxu0 0.0
  %374 = vmatpush1.msra.mxu0 0.0
  %375 = vmatprep.subr.mxu0 0.0
  %376 = vmatpush1.msra.mxu0 0.0
  %377 = vmatprep.subr.mxu0 0.0
  %378 = vmatpush1.msra.mxu0 0.0
  %379 = vmatprep.subr.mxu0 0.0
  %380 = vmatpush1.msra.mxu0 0.0
  %381 = vmatprep.subr.mxu0 0.0
  %382 = vmatpush1.msra.mxu0 0.0
  %383 = vmatprep.subr.mxu0 0.0
  %384 = vmatpush1.msra.mxu0 0.0
  %385 = vmatprep.subr.mxu0 0.0
  %386 = vmatpush1.msra.mxu0 0.0
  %387 = vmatprep.subr.mxu0 0.0
  %388 = vmatpush1.msra.mxu0 0.0
  %389 = vmatprep.subr.mxu0 0.0
  %390 = vmatpush1.msra.mxu0 0.0
  %391 = vmatprep.subr.mxu0 0.0
  %392 = vmatpush1.msra.mxu0 0.0
  %393 = vmatprep.subr.mxu0 0.0
  %394 = vmatpush1.msra.mxu0 0.0
  %395 = vmatprep.subr.mxu0 0.0
  %396 = vmatpush1.msra.mxu0 0.0
  %397 = vmatprep.subr.mxu0 0.0
  %398 = vmatpush1.msra.mxu0 0.0
  %399 = vmatprep.subr.mxu0 0.0
  %400 = vmatpush1.msra.mxu0 0.0
  %401 = vmatprep.subr.mxu0 0.0
  %402 = vmatpush1.msra.mxu0 0.0
  %403 = vmatprep.subr.mxu0 0.0
  %404 = vmatpush1.msra.mxu0 0.0
  %405 = vmatprep.subr.mxu0 0.0
  %406 = vmatpush1.msra.mxu0 0.0
  %407 = vmatprep.subr.mxu0 0.0
  %408 = vmatpush1.msra.mxu0 0.0
  %409 = vmatprep.subr.mxu0 0.0
  %410 = vmatpush1.msra.mxu0 0.0
  %411 = vmatprep.subr.mxu0 0.0
  %412 = vmatpush1.msra.mxu0 0.0
  %413 = vmatprep.subr.mxu0 0.0
  %414 = vmatpush1.msra.mxu0 0.0
  %415 = vmatprep.mubr.f32.mxu0 0.0
  %416 = vmatmul.mubr.f32.gmra.mrb[0].mxu0 %v71
  %v417 = vpop.f32.mrb[0].mxu0
  %v418 = vadd.f32 %v35, %v417
  %v419 = vpop.f32.mrb[0].mxu0
  %v420 = vadd.f32 %v35, %v419
  %421 = vdwg.mxu0
  %422 = vmatprep.subr.mxu0 %v92
  %423 = vmatpush1.msra.mxu0 %v90
  %424 = vmatprep.subr.mxu0 0.0
  %425 = vmatpush1.msra.mxu0 0.0
  %426 = vmatprep.subr.mxu0 0.0
  %427 = vmatpush1.msra.mxu0 0.0
  %428 = vmatprep.subr.mxu0 0.0
  %429 = vmatpush1.msra.mxu0 0.0
  %430 = vmatprep.subr.mxu0 0.0
  %431 = vmatpush1.msra.mxu0 0.0
  %432 = vmatprep.subr.mxu0 0.0
  %433 = vmatpush1.msra.mxu0 0.0
  %434 = vmatprep.subr.mxu0 0.0
  %435 = vmatpush1.msra.mxu0 0.0
  %436 = vmatprep.subr.mxu0 0.0
  %437 = vmatpush1.msra.mxu0 0.0
  %438 = vmatprep.subr.mxu0 0.0
  %439 = vmatpush1.msra.mxu0 0.0
  %440 = vmatprep.subr.mxu0 0.0
  %441 = vmatpush1.msra.mxu0 0.0
  %442 = vmatprep.subr.mxu0 0.0
  %443 = vmatpush1.msra.mxu0 0.0
  %444 = vmatprep.subr.mxu0 0.0
  %445 = vmatpush1.msra.mxu0 0.0
  %446 = vmatprep.subr.mxu0 0.0
  %447 = vmatpush1.msra.mxu0 0.0
  %448 = vmatprep.subr.mxu0 0.0
  %449 = vmatpush1.msra.mxu0 0.0
  %450 = vmatprep.subr.mxu0 0.0
  %451 = vmatpush1.msra.mxu0 0.0
  %452 = vmatprep.subr.mxu0 0.0
  %453 = vmatpush1.msra.mxu0 0.0
  %454 = vmatprep.subr.mxu0 0.0
  %455 = vmatpush1.msra.mxu0 0.0
  %456 = vmatprep.subr.mxu0 0.0
  %457 = vmatpush1.msra.mxu0 0.0
  %458 = vmatprep.subr.mxu0 0.0
  %459 = vmatpush1.msra.mxu0 0.0
  %460 = vmatprep.subr.mxu0 0.0
  %461 = vmatpush1.msra.mxu0 0.0
  %462 = vmatprep.subr.mxu0 0.0
  %463 = vmatpush1.msra.mxu0 0.0
  %464 = vmatprep.subr.mxu0 0.0
  %465 = vmatpush1.msra.mxu0 0.0
  %466 = vmatprep.subr.mxu0 0.0
  %467 = vmatpush1.msra.mxu0 0.0
  %468 = vmatprep.subr.mxu0 0.0
  %469 = vmatpush1.msra.mxu0 0.0
  %470 = vmatprep.subr.mxu0 0.0
  %471 = vmatpush1.msra.mxu0 0.0
  %472 = vmatprep.subr.mxu0 0.0
  %473 = vmatpush1.msra.mxu0 0.0
  %474 = vmatprep.subr.mxu0 0.0
  %475 = vmatpush1.msra.mxu0 0.0
  %476 = vmatprep.subr.mxu0 0.0
  %477 = vmatpush1.msra.mxu0 0.0
  %478 = vmatprep.subr.mxu0 0.0
  %479 = vmatpush1.msra.mxu0 0.0
  %480 = vmatprep.subr.mxu0 0.0
  %481 = vmatpush1.msra.mxu0 0.0
  %482 = vmatprep.subr.mxu0 0.0
  %483 = vmatpush1.msra.mxu0 0.0
  %484 = vmatprep.subr.mxu0 0.0
  %485 = vmatpush1.msra.mxu0 0.0
  %486 = vmatprep.mubr.f32.mxu0 0.0
  %487 = vmatmul.mubr.f32.gmra.mrb[0].mxu0 %v71
  %v488 = vpop.f32.mrb[0].mxu0
  %v489 = vadd.f32 %v35, %v488
  %v490 = vpop.f32.mrb[0].mxu0
  %v491 = vadd.f32 %v35, %v490
  %492 = vdwg.mxu0
  %493 = vmatprep.subr.mxu0 %v96
  %494 = vmatpush1.msra.mxu0 %v94
  %495 = vmatprep.subr.mxu0 0.0
  %496 = vmatpush1.msra.mxu0 0.0
  %497 = vmatprep.subr.mxu0 0.0
  %498 = vmatpush1.msra.mxu0 0.0
  %499 = vmatprep.subr.mxu0 0.0
  %500 = vmatpush1.msra.mxu0 0.0
  %501 = vmatprep.subr.mxu0 0.0
  %502 = vmatpush1.msra.mxu0 0.0
  %503 = vmatprep.subr.mxu0 0.0
  %504 = vmatpush1.msra.mxu0 0.0
  %505 = vmatprep.subr.mxu0 0.0
  %506 = vmatpush1.msra.mxu0 0.0
  %507 = vmatprep.subr.mxu0 0.0
  %508 = vmatpush1.msra.mxu0 0.0
  %509 = vmatprep.subr.mxu0 0.0
  %510 = vmatpush1.msra.mxu0 0.0
  %511 = vmatprep.subr.mxu0 0.0
  %512 = vmatpush1.msra.mxu0 0.0
  %513 = vmatprep.subr.mxu0 0.0
  %514 = vmatpush1.msra.mxu0 0.0
  %515 = vmatprep.subr.mxu0 0.0
  %516 = vmatpush1.msra.mxu0 0.0
  %517 = vmatprep.subr.mxu0 0.0
  %518 = vmatpush1.msra.mxu0 0.0
  %519 = vmatprep.subr.mxu0 0.0
  %520 = vmatpush1.msra.mxu0 0.0
  %521 = vmatprep.subr.mxu0 0.0
  %522 = vmatpush1.msra.mxu0 0.0
  %523 = vmatprep.subr.mxu0 0.0
  %524 = vmatpush1.msra.mxu0 0.0
  %525 = vmatprep.subr.mxu0 0.0
  %526 = vmatpush1.msra.mxu0 0.0
  %527 = vmatprep.subr.mxu0 0.0
  %528 = vmatpush1.msra.mxu0 0.0
  %529 = vmatprep.subr.mxu0 0.0
  %530 = vmatpush1.msra.mxu0 0.0
  %531 = vmatprep.subr.mxu0 0.0
  %532 = vmatpush1.msra.mxu0 0.0
  %533 = vmatprep.subr.mxu0 0.0
  %534 = vmatpush1.msra.mxu0 0.0
  %535 = vmatprep.subr.mxu0 0.0
  %536 = vmatpush1.msra.mxu0 0.0
  %537 = vmatprep.subr.mxu0 0.0
  %538 = vmatpush1.msra.mxu0 0.0
  %539 = vmatprep.subr.mxu0 0.0
  %540 = vmatpush1.msra.mxu0 0.0
  %541 = vmatprep.subr.mxu0 0.0
  %542 = vmatpush1.msra.mxu0 0.0
  %543 = vmatprep.subr.mxu0 0.0
  %544 = vmatpush1.msra.mxu0 0.0
  %545 = vmatprep.subr.mxu0 0.0
  %546 = vmatpush1.msra.mxu0 0.0
  %547 = vmatprep.subr.mxu0 0.0
  %548 = vmatpush1.msra.mxu0 0.0
  %549 = vmatprep.subr.mxu0 0.0
  %550 = vmatpush1.msra.mxu0 0.0
  %551 = vmatprep.subr.mxu0 0.0
  %552 = vmatpush1.msra.mxu0 0.0
  %553 = vmatprep.subr.mxu0 0.0
  %554 = vmatpush1.msra.mxu0 0.0
  %555 = vmatprep.subr.mxu0 0.0
  %556 = vmatpush1.msra.mxu0 0.0
  %557 = vmatprep.mubr.f32.mxu0 0.0
  %558 = vmatmul.mubr.f32.gmra.mrb[0].mxu0 %v71
  %v559 = vpop.f32.mrb[0].mxu0
  %v560 = vadd.f32 %v35, %v559
  %v561 = vpop.f32.mrb[0].mxu0
  %v562 = vadd.f32 %v35, %v561
  %563 = vdwg.mxu0
  %564 = vmatprep.subr.mxu0 %v100
  %565 = vmatpush1.msra.mxu0 %v98
  %566 = vmatprep.subr.mxu0 0.0
  %567 = vmatpush1.msra.mxu0 0.0
  %568 = vmatprep.subr.mxu0 0.0
  %569 = vmatpush1.msra.mxu0 0.0
  %570 = vmatprep.subr.mxu0 0.0
  %571 = vmatpush1.msra.mxu0 0.0
  %572 = vmatprep.subr.mxu0 0.0
  %573 = vmatpush1.msra.mxu0 0.0
  %574 = vmatprep.subr.mxu0 0.0
  %575 = vmatpush1.msra.mxu0 0.0
  %576 = vmatprep.subr.mxu0 0.0
  %577 = vmatpush1.msra.mxu0 0.0
  %578 = vmatprep.subr.mxu0 0.0
  %579 = vmatpush1.msra.mxu0 0.0
  %580 = vmatprep.subr.mxu0 0.0
  %581 = vmatpush1.msra.mxu0 0.0
  %582 = vmatprep.subr.mxu0 0.0
  %583 = vmatpush1.msra.mxu0 0.0
  %584 = vmatprep.subr.mxu0 0.0
  %585 = vmatpush1.msra.mxu0 0.0
  %586 = vmatprep.subr.mxu0 0.0
  %587 = vmatpush1.msra.mxu0 0.0
  %588 = vmatprep.subr.mxu0 0.0
  %589 = vmatpush1.msra.mxu0 0.0
  %590 = vmatprep.subr.mxu0 0.0
  %591 = vmatpush1.msra.mxu0 0.0
  %592 = vmatprep.subr.mxu0 0.0
  %593 = vmatpush1.msra.mxu0 0.0
  %594 = vmatprep.subr.mxu0 0.0
  %595 = vmatpush1.msra.mxu0 0.0
  %596 = vmatprep.subr.mxu0 0.0
  %597 = vmatpush1.msra.mxu0 0.0
  %598 = vmatprep.subr.mxu0 0.0
  %599 = vmatpush1.msra.mxu0 0.0
  %600 = vmatprep.subr.mxu0 0.0
  %601 = vmatpush1.msra.mxu0 0.0
  %602 = vmatprep.subr.mxu0 0.0
  %603 = vmatpush1.msra.mxu0 0.0
  %604 = vmatprep.subr.mxu0 0.0
  %605 = vmatpush1.msra.mxu0 0.0
  %606 = vmatprep.subr.mxu0 0.0
  %607 = vmatpush1.msra.mxu0 0.0
  %608 = vmatprep.subr.mxu0 0.0
  %609 = vmatpush1.msra.mxu0 0.0
  %610 = vmatprep.subr.mxu0 0.0
  %611 = vmatpush1.msra.mxu0 0.0
  %612 = vmatprep.subr.mxu0 0.0
  %613 = vmatpush1.msra.mxu0 0.0
  %614 = vmatprep.subr.mxu0 0.0
  %615 = vmatpush1.msra.mxu0 0.0
  %616 = vmatprep.subr.mxu0 0.0
  %617 = vmatpush1.msra.mxu0 0.0
  %618 = vmatprep.subr.mxu0 0.0
  %619 = vmatpush1.msra.mxu0 0.0
  %620 = vmatprep.subr.mxu0 0.0
  %621 = vmatpush1.msra.mxu0 0.0
  %622 = vmatprep.subr.mxu0 0.0
  %623 = vmatpush1.msra.mxu0 0.0
  %624 = vmatprep.subr.mxu0 0.0
  %625 = vmatpush1.msra.mxu0 0.0
  %626 = vmatprep.subr.mxu0 0.0
  %627 = vmatpush1.msra.mxu0 0.0
  %628 = vmatprep.mubr.f32.mxu0 0.0
  %629 = vmatmul.mubr.f32.gmra.mrb[0].mxu0 %v71
  %v630 = vpop.f32.mrb[0].mxu0
  %v631 = vadd.f32 %v35, %v630
  %v632 = vpop.f32.mrb[0].mxu0
  %v633 = vadd.f32 %v35, %v632
  %634 = vdwg.mxu0
  %635 = vmatprep.subr.mxu0 %v104
  %636 = vmatpush1.msra.mxu0 %v102
  %637 = vmatprep.subr.mxu0 0.0
  %638 = vmatpush1.msra.mxu0 0.0
  %639 = vmatprep.subr.mxu0 0.0
  %640 = vmatpush1.msra.mxu0 0.0
  %641 = vmatprep.subr.mxu0 0.0
  %642 = vmatpush1.msra.mxu0 0.0
  %643 = vmatprep.subr.mxu0 0.0
  %644 = vmatpush1.msra.mxu0 0.0
  %645 = vmatprep.subr.mxu0 0.0
  %646 = vmatpush1.msra.mxu0 0.0
  %647 = vmatprep.subr.mxu0 0.0
  %648 = vmatpush1.msra.mxu0 0.0
  %649 = vmatprep.subr.mxu0 0.0
  %650 = vmatpush1.msra.mxu0 0.0
  %651 = vmatprep.subr.mxu0 0.0
  %652 = vmatpush1.msra.mxu0 0.0
  %653 = vmatprep.subr.mxu0 0.0
  %654 = vmatpush1.msra.mxu0 0.0
  %655 = vmatprep.subr.mxu0 0.0
  %656 = vmatpush1.msra.mxu0 0.0
  %657 = vmatprep.subr.mxu0 0.0
  %658 = vmatpush1.msra.mxu0 0.0
  %659 = vmatprep.subr.mxu0 0.0
  %660 = vmatpush1.msra.mxu0 0.0
  %661 = vmatprep.subr.mxu0 0.0
  %662 = vmatpush1.msra.mxu0 0.0
  %663 = vmatprep.subr.mxu0 0.0
  %664 = vmatpush1.msra.mxu0 0.0
  %665 = vmatprep.subr.mxu0 0.0
  %666 = vmatpush1.msra.mxu0 0.0
  %667 = vmatprep.subr.mxu0 0.0
  %668 = vmatpush1.msra.mxu0 0.0
  %669 = vmatprep.subr.mxu0 0.0
  %670 = vmatpush1.msra.mxu0 0.0
  %671 = vmatprep.subr.mxu0 0.0
  %672 = vmatpush1.msra.mxu0 0.0
  %673 = vmatprep.subr.mxu0 0.0
  %674 = vmatpush1.msra.mxu0 0.0
  %675 = vmatprep.subr.mxu0 0.0
  %676 = vmatpush1.msra.mxu0 0.0
  %677 = vmatprep.subr.mxu0 0.0
  %678 = vmatpush1.msra.mxu0 0.0
  %679 = vmatprep.subr.mxu0 0.0
  %680 = vmatpush1.msra.mxu0 0.0
  %681 = vmatprep.subr.mxu0 0.0
  %682 = vmatpush1.msra.mxu0 0.0
  %683 = vmatprep.subr.mxu0 0.0
  %684 = vmatpush1.msra.mxu0 0.0
  %685 = vmatprep.subr.mxu0 0.0
  %686 = vmatpush1.msra.mxu0 0.0
  %687 = vmatprep.subr.mxu0 0.0
  %688 = vmatpush1.msra.mxu0 0.0
  %689 = vmatprep.subr.mxu0 0.0
  %690 = vmatpush1.msra.mxu0 0.0
  %691 = vmatprep.subr.mxu0 0.0
  %692 = vmatpush1.msra.mxu0 0.0
  %693 = vmatprep.subr.mxu0 0.0
  %694 = vmatpush1.msra.mxu0 0.0
  %695 = vmatprep.subr.mxu0 0.0
  %696 = vmatpush1.msra.mxu0 0.0
  %697 = vmatprep.subr.mxu0 0.0
  %698 = vmatpush1.msra.mxu0 0.0
  %699 = vmatprep.mubr.f32.mxu0 0.0
  %700 = vmatmul.mubr.f32.gmra.mrb[0].mxu0 %v71
  %v701 = vpop.f32.mrb[0].mxu0
  %v702 = vadd.f32 %v35, %v701
  %v703 = vpop.f32.mrb[0].mxu0
  %v704 = vadd.f32 %v35, %v703
  %705 = vdwg.mxu0
  %706 = vmatprep.subr.mxu0 %v108
  %707 = vmatpush1.msra.mxu0 %v106
  %708 = vmatprep.subr.mxu0 0.0
  %709 = vmatpush1.msra.mxu0 0.0
  %710 = vmatprep.subr.mxu0 0.0
  %711 = vmatpush1.msra.mxu0 0.0
  %712 = vmatprep.subr.mxu0 0.0
  %713 = vmatpush1.msra.mxu0 0.0
  %714 = vmatprep.subr.mxu0 0.0
  %715 = vmatpush1.msra.mxu0 0.0
  %716 = vmatprep.subr.mxu0 0.0
  %717 = vmatpush1.msra.mxu0 0.0
  %718 = vmatprep.subr.mxu0 0.0
  %719 = vmatpush1.msra.mxu0 0.0
  %720 = vmatprep.subr.mxu0 0.0
  %721 = vmatpush1.msra.mxu0 0.0
  %722 = vmatprep.subr.mxu0 0.0
  %723 = vmatpush1.msra.mxu0 0.0
  %724 = vmatprep.subr.mxu0 0.0
  %725 = vmatpush1.msra.mxu0 0.0
  %726 = vmatprep.subr.mxu0 0.0
  %727 = vmatpush1.msra.mxu0 0.0
  %728 = vmatprep.subr.mxu0 0.0
  %729 = vmatpush1.msra.mxu0 0.0
  %730 = vmatprep.subr.mxu0 0.0
  %731 = vmatpush1.msra.mxu0 0.0
  %732 = vmatprep.subr.mxu0 0.0
  %733 = vmatpush1.msra.mxu0 0.0
  %734 = vmatprep.subr.mxu0 0.0
  %735 = vmatpush1.msra.mxu0 0.0
  %736 = vmatprep.subr.mxu0 0.0
  %737 = vmatpush1.msra.mxu0 0.0
  %738 = vmatprep.subr.mxu0 0.0
  %739 = vmatpush1.msra.mxu0 0.0
  %740 = vmatprep.subr.mxu0 0.0
  %741 = vmatpush1.msra.mxu0 0.0
  %742 = vmatprep.subr.mxu0 0.0
  %743 = vmatpush1.msra.mxu0 0.0
  %744 = vmatprep.subr.mxu0 0.0
  %745 = vmatpush1.msra.mxu0 0.0
  %746 = vmatprep.subr.mxu0 0.0
  %747 = vmatpush1.msra.mxu0 0.0
  %748 = vmatprep.subr.mxu0 0.0
  %749 = vmatpush1.msra.mxu0 0.0
  %750 = vmatprep.subr.mxu0 0.0
  %751 = vmatpush1.msra.mxu0 0.0
  %752 = vmatprep.subr.mxu0 0.0
  %753 = vmatpush1.msra.mxu0 0.0
  %754 = vmatprep.subr.mxu0 0.0
  %755 = vmatpush1.msra.mxu0 0.0
  %756 = vmatprep.subr.mxu0 0.0
  %757 = vmatpush1.msra.mxu0 0.0
  %758 = vmatprep.subr.mxu0 0.0
  %759 = vmatpush1.msra.mxu0 0.0
  %760 = vmatprep.subr.mxu0 0.0
  %761 = vmatpush1.msra.mxu0 0.0
  %762 = vmatprep.subr.mxu0 0.0
  %763 = vmatpush1.msra.mxu0 0.0
  %764 = vmatprep.subr.mxu0 0.0
  %765 = vmatpush1.msra.mxu0 0.0
  %766 = vmatprep.subr.mxu0 0.0
  %767 = vmatpush1.msra.mxu0 0.0
  %768 = vmatprep.subr.mxu0 0.0
  %769 = vmatpush1.msra.mxu0 0.0
  %770 = vmatprep.mubr.f32.mxu0 0.0
  %771 = vmatmul.mubr.f32.gmra.mrb[0].mxu0 %v71
  %v772 = vpop.f32.mrb[0].mxu0
  %v773 = vadd.f32 %v35, %v772
  %v774 = vpop.f32.mrb[0].mxu0
  %v775 = vadd.f32 %v35, %v774
  %776 = vdwg.mxu0
  %777 = vmatprep.subr.mxu0 %v112
  %778 = vmatpush1.msra.mxu0 %v110
  %779 = vmatprep.subr.mxu0 0.0
  %780 = vmatpush1.msra.mxu0 0.0
  %781 = vmatprep.subr.mxu0 0.0
  %782 = vmatpush1.msra.mxu0 0.0
  %783 = vmatprep.subr.mxu0 0.0
  %784 = vmatpush1.msra.mxu0 0.0
  %785 = vmatprep.subr.mxu0 0.0
  %786 = vmatpush1.msra.mxu0 0.0
  %787 = vmatprep.subr.mxu0 0.0
  %788 = vmatpush1.msra.mxu0 0.0
  %789 = vmatprep.subr.mxu0 0.0
  %790 = vmatpush1.msra.mxu0 0.0
  %791 = vmatprep.subr.mxu0 0.0
  %792 = vmatpush1.msra.mxu0 0.0
  %793 = vmatprep.subr.mxu0 0.0
  %794 = vmatpush1.msra.mxu0 0.0
  %795 = vmatprep.subr.mxu0 0.0
  %796 = vmatpush1.msra.mxu0 0.0
  %797 = vmatprep.subr.mxu0 0.0
  %798 = vmatpush1.msra.mxu0 0.0
  %799 = vmatprep.subr.mxu0 0.0
  %800 = vmatpush1.msra.mxu0 0.0
  %801 = vmatprep.subr.mxu0 0.0
  %802 = vmatpush1.msra.mxu0 0.0
  %803 = vmatprep.subr.mxu0 0.0
  %804 = vmatpush1.msra.mxu0 0.0
  %805 = vmatprep.subr.mxu0 0.0
  %806 = vmatpush1.msra.mxu0 0.0
  %807 = vmatprep.subr.mxu0 0.0
  %808 = vmatpush1.msra.mxu0 0.0
  %809 = vmatprep.subr.mxu0 0.0
  %810 = vmatpush1.msra.mxu0 0.0
  %811 = vmatprep.subr.mxu0 0.0
  %812 = vmatpush1.msra.mxu0 0.0
  %813 = vmatprep.subr.mxu0 0.0
  %814 = vmatpush1.msra.mxu0 0.0
  %815 = vmatprep.subr.mxu0 0.0
  %816 = vmatpush1.msra.mxu0 0.0
  %817 = vmatprep.subr.mxu0 0.0
  %818 = vmatpush1.msra.mxu0 0.0
  %819 = vmatprep.subr.mxu0 0.0
  %820 = vmatpush1.msra.mxu0 0.0
  %821 = vmatprep.subr.mxu0 0.0
  %822 = vmatpush1.msra.mxu0 0.0
  %823 = vmatprep.subr.mxu0 0.0
  %824 = vmatpush1.msra.mxu0 0.0
  %825 = vmatprep.subr.mxu0 0.0
  %826 = vmatpush1.msra.mxu0 0.0
  %827 = vmatprep.subr.mxu0 0.0
  %828 = vmatpush1.msra.mxu0 0.0
  %829 = vmatprep.subr.mxu0 0.0
  %830 = vmatpush1.msra.mxu0 0.0
  %831 = vmatprep.subr.mxu0 0.0
  %832 = vmatpush1.msra.mxu0 0.0
  %833 = vmatprep.subr.mxu0 0.0
  %834 = vmatpush1.msra.mxu0 0.0
  %835 = vmatprep.subr.mxu0 0.0
  %836 = vmatpush1.msra.mxu0 0.0
  %837 = vmatprep.subr.mxu0 0.0
  %838 = vmatpush1.msra.mxu0 0.0
  %839 = vmatprep.subr.mxu0 0.0
  %840 = vmatpush1.msra.mxu0 0.0
  %841 = vmatprep.mubr.f32.mxu0 0.0
  %842 = vmatmul.mubr.f32.gmra.mrb[0].mxu0 %v71
  %v843 = vpop.f32.mrb[0].mxu0
  %v844 = vadd.f32 %v35, %v843
  %v845 = vpop.f32.mrb[0].mxu0
  %v846 = vadd.f32 %v35, %v845
  %847 = vdwg.mxu0
  %848 = vmatprep.subr.mxu0 %v116
  %849 = vmatpush1.msra.mxu0 %v114
  %850 = vmatprep.subr.mxu0 0.0
  %851 = vmatpush1.msra.mxu0 0.0
  %852 = vmatprep.subr.mxu0 0.0
  %853 = vmatpush1.msra.mxu0 0.0
  %854 = vmatprep.subr.mxu0 0.0
  %855 = vmatpush1.msra.mxu0 0.0
  %856 = vmatprep.subr.mxu0 0.0
  %857 = vmatpush1.msra.mxu0 0.0
  %858 = vmatprep.subr.mxu0 0.0
  %859 = vmatpush1.msra.mxu0 0.0
  %860 = vmatprep.subr.mxu0 0.0
  %861 = vmatpush1.msra.mxu0 0.0
  %862 = vmatprep.subr.mxu0 0.0
  %863 = vmatpush1.msra.mxu0 0.0
  %864 = vmatprep.subr.mxu0 0.0
  %865 = vmatpush1.msra.mxu0 0.0
  %866 = vmatprep.subr.mxu0 0.0
  %867 = vmatpush1.msra.mxu0 0.0
  %868 = vmatprep.subr.mxu0 0.0
  %869 = vmatpush1.msra.mxu0 0.0
  %870 = vmatprep.subr.mxu0 0.0
  %871 = vmatpush1.msra.mxu0 0.0
  %872 = vmatprep.subr.mxu0 0.0
  %873 = vmatpush1.msra.mxu0 0.0
  %874 = vmatprep.subr.mxu0 0.0
  %875 = vmatpush1.msra.mxu0 0.0
  %876 = vmatprep.subr.mxu0 0.0
  %877 = vmatpush1.msra.mxu0 0.0
  %878 = vmatprep.subr.mxu0 0.0
  %879 = vmatpush1.msra.mxu0 0.0
  %880 = vmatprep.subr.mxu0 0.0
  %881 = vmatpush1.msra.mxu0 0.0
  %882 = vmatprep.subr.mxu0 0.0
  %883 = vmatpush1.msra.mxu0 0.0
  %884 = vmatprep.subr.mxu0 0.0
  %885 = vmatpush1.msra.mxu0 0.0
  %886 = vmatprep.subr.mxu0 0.0
  %887 = vmatpush1.msra.mxu0 0.0
  %888 = vmatprep.subr.mxu0 0.0
  %889 = vmatpush1.msra.mxu0 0.0
  %890 = vmatprep.subr.mxu0 0.0
  %891 = vmatpush1.msra.mxu0 0.0
  %892 = vmatprep.subr.mxu0 0.0
  %893 = vmatpush1.msra.mxu0 0.0
  %894 = vmatprep.subr.mxu0 0.0
  %895 = vmatpush1.msra.mxu0 0.0
  %896 = vmatprep.subr.mxu0 0.0
  %897 = vmatpush1.msra.mxu0 0.0
  %898 = vmatprep.subr.mxu0 0.0
  %899 = vmatpush1.msra.mxu0 0.0
  %900 = vmatprep.subr.mxu0 0.0
  %901 = vmatpush1.msra.mxu0 0.0
  %902 = vmatprep.subr.mxu0 0.0
  %903 = vmatpush1.msra.mxu0 0.0
  %904 = vmatprep.subr.mxu0 0.0
  %905 = vmatpush1.msra.mxu0 0.0
  %906 = vmatprep.subr.mxu0 0.0
  %907 = vmatpush1.msra.mxu0 0.0
  %908 = vmatprep.subr.mxu0 0.0
  %909 = vmatpush1.msra.mxu0 0.0
  %910 = vmatprep.subr.mxu0 0.0
  %911 = vmatpush1.msra.mxu0 0.0
  %912 = vmatprep.mubr.f32.mxu0 0.0
  %913 = vmatmul.mubr.f32.gmra.mrb[0].mxu0 %v71
  %v914 = vpop.f32.mrb[0].mxu0
  %v915 = vadd.f32 %v35, %v914
  %v916 = vpop.f32.mrb[0].mxu0
  %v917 = vadd.f32 %v35, %v916
  %918 = vdwg.mxu0
  %919 = vmatprep.subr.mxu0 %v120
  %920 = vmatpush1.msra.mxu0 %v118
  %921 = vmatprep.subr.mxu0 0.0
  %922 = vmatpush1.msra.mxu0 0.0
  %923 = vmatprep.subr.mxu0 0.0
  %924 = vmatpush1.msra.mxu0 0.0
  %925 = vmatprep.subr.mxu0 0.0
  %926 = vmatpush1.msra.mxu0 0.0
  %927 = vmatprep.subr.mxu0 0.0
  %928 = vmatpush1.msra.mxu0 0.0
  %929 = vmatprep.subr.mxu0 0.0
  %930 = vmatpush1.msra.mxu0 0.0
  %931 = vmatprep.subr.mxu0 0.0
  %932 = vmatpush1.msra.mxu0 0.0
  %933 = vmatprep.subr.mxu0 0.0
  %934 = vmatpush1.msra.mxu0 0.0
  %935 = vmatprep.subr.mxu0 0.0
  %936 = vmatpush1.msra.mxu0 0.0
  %937 = vmatprep.subr.mxu0 0.0
  %938 = vmatpush1.msra.mxu0 0.0
  %939 = vmatprep.subr.mxu0 0.0
  %940 = vmatpush1.msra.mxu0 0.0
  %941 = vmatprep.subr.mxu0 0.0
  %942 = vmatpush1.msra.mxu0 0.0
  %943 = vmatprep.subr.mxu0 0.0
  %944 = vmatpush1.msra.mxu0 0.0
  %945 = vmatprep.subr.mxu0 0.0
  %946 = vmatpush1.msra.mxu0 0.0
  %947 = vmatprep.subr.mxu0 0.0
  %948 = vmatpush1.msra.mxu0 0.0
  %949 = vmatprep.subr.mxu0 0.0
  %950 = vmatpush1.msra.mxu0 0.0
  %951 = vmatprep.subr.mxu0 0.0
  %952 = vmatpush1.msra.mxu0 0.0
  %953 = vmatprep.subr.mxu0 0.0
  %954 = vmatpush1.msra.mxu0 0.0
  %955 = vmatprep.subr.mxu0 0.0
  %956 = vmatpush1.msra.mxu0 0.0
  %957 = vmatprep.subr.mxu0 0.0
  %958 = vmatpush1.msra.mxu0 0.0
  %959 = vmatprep.subr.mxu0 0.0
  %960 = vmatpush1.msra.mxu0 0.0
  %961 = vmatprep.subr.mxu0 0.0
  %962 = vmatpush1.msra.mxu0 0.0
  %963 = vmatprep.subr.mxu0 0.0
  %964 = vmatpush1.msra.mxu0 0.0
  %965 = vmatprep.subr.mxu0 0.0
  %966 = vmatpush1.msra.mxu0 0.0
  %967 = vmatprep.subr.mxu0 0.0
  %968 = vmatpush1.msra.mxu0 0.0
  %969 = vmatprep.subr.mxu0 0.0
  %970 = vmatpush1.msra.mxu0 0.0
  %971 = vmatprep.subr.mxu0 0.0
  %972 = vmatpush1.msra.mxu0 0.0
  %973 = vmatprep.subr.mxu0 0.0
  %974 = vmatpush1.msra.mxu0 0.0
  %975 = vmatprep.subr.mxu0 0.0
  %976 = vmatpush1.msra.mxu0 0.0
  %977 = vmatprep.subr.mxu0 0.0
  %978 = vmatpush1.msra.mxu0 0.0
  %979 = vmatprep.subr.mxu0 0.0
  %980 = vmatpush1.msra.mxu0 0.0
  %981 = vmatprep.subr.mxu0 0.0
  %982 = vmatpush1.msra.mxu0 0.0
  %983 = vmatprep.mubr.f32.mxu0 0.0
  %984 = vmatmul.mubr.f32.gmra.mrb[0].mxu0 %v71
  %v985 = vpop.f32.mrb[0].mxu0
  %v986 = vadd.f32 %v35, %v985
  %v987 = vpop.f32.mrb[0].mxu0
  %v988 = vadd.f32 %v35, %v987
  %989 = vdwg.mxu0
  %990 = vmatprep.subr.mxu0 %v124
  %991 = vmatpush1.msra.mxu0 %v122
  %992 = vmatprep.subr.mxu0 0.0
  %993 = vmatpush1.msra.mxu0 0.0
  %994 = vmatprep.subr.mxu0 0.0
  %995 = vmatpush1.msra.mxu0 0.0
  %996 = vmatprep.subr.mxu0 0.0
  %997 = vmatpush1.msra.mxu0 0.0
  %998 = vmatprep.subr.mxu0 0.0
  %999 = vmatpush1.msra.mxu0 0.0
  %1000 = vmatprep.subr.mxu0 0.0
  %1001 = vmatpush1.msra.mxu0 0.0
  %1002 = vmatprep.subr.mxu0 0.0
  %1003 = vmatpush1.msra.mxu0 0.0
  %1004 = vmatprep.subr.mxu0 0.0
  %1005 = vmatpush1.msra.mxu0 0.0
  %1006 = vmatprep.subr.mxu0 0.0
  %1007 = vmatpush1.msra.mxu0 0.0
  %1008 = vmatprep.subr.mxu0 0.0
  %1009 = vmatpush1.msra.mxu0 0.0
  %1010 = vmatprep.subr.mxu0 0.0
  %1011 = vmatpush1.msra.mxu0 0.0
  %1012 = vmatprep.subr.mxu0 0.0
  %1013 = vmatpush1.msra.mxu0 0.0
  %1014 = vmatprep.subr.mxu0 0.0
  %1015 = vmatpush1.msra.mxu0 0.0
  %1016 = vmatprep.subr.mxu0 0.0
  %1017 = vmatpush1.msra.mxu0 0.0
  %1018 = vmatprep.subr.mxu0 0.0
  %1019 = vmatpush1.msra.mxu0 0.0
  %1020 = vmatprep.subr.mxu0 0.0
  %1021 = vmatpush1.msra.mxu0 0.0
  %1022 = vmatprep.subr.mxu0 0.0
  %1023 = vmatpush1.msra.mxu0 0.0
  %1024 = vmatprep.subr.mxu0 0.0
  %1025 = vmatpush1.msra.mxu0 0.0
  %1026 = vmatprep.subr.mxu0 0.0
  %1027 = vmatpush1.msra.mxu0 0.0
  %1028 = vmatprep.subr.mxu0 0.0
  %1029 = vmatpush1.msra.mxu0 0.0
  %1030 = vmatprep.subr.mxu0 0.0
  %1031 = vmatpush1.msra.mxu0 0.0
  %1032 = vmatprep.subr.mxu0 0.0
  %1033 = vmatpush1.msra.mxu0 0.0
  %1034 = vmatprep.subr.mxu0 0.0
  %1035 = vmatpush1.msra.mxu0 0.0
  %1036 = vmatprep.subr.mxu0 0.0
  %1037 = vmatpush1.msra.mxu0 0.0
  %1038 = vmatprep.subr.mxu0 0.0
  %1039 = vmatpush1.msra.mxu0 0.0
  %1040 = vmatprep.subr.mxu0 0.0
  %1041 = vmatpush1.msra.mxu0 0.0
  %1042 = vmatprep.subr.mxu0 0.0
  %1043 = vmatpush1.msra.mxu0 0.0
  %1044 = vmatprep.subr.mxu0 0.0
  %1045 = vmatpush1.msra.mxu0 0.0
  %1046 = vmatprep.subr.mxu0 0.0
  %1047 = vmatpush1.msra.mxu0 0.0
  %1048 = vmatprep.subr.mxu0 0.0
  %1049 = vmatpush1.msra.mxu0 0.0
  %1050 = vmatprep.subr.mxu0 0.0
  %1051 = vmatpush1.msra.mxu0 0.0
  %1052 = vmatprep.subr.mxu0 0.0
  %1053 = vmatpush1.msra.mxu0 0.0
  %1054 = vmatprep.mubr.f32.mxu0 0.0
  %1055 = vmatmul.mubr.f32.gmra.mrb[0].mxu0 %v71
  %v1056 = vpop.f32.mrb[0].mxu0
  %v1057 = vadd.f32 %v35, %v1056
  %v1058 = vpop.f32.mrb[0].mxu0
  %v1059 = vadd.f32 %v35, %v1058
  %1060 = vdwg.mxu0
  %1061 = vmatprep.subr.mxu0 %v128
  %1062 = vmatpush1.msra.mxu0 %v126
  %1063 = vmatprep.subr.mxu0 0.0
  %1064 = vmatpush1.msra.mxu0 0.0
  %1065 = vmatprep.subr.mxu0 0.0
  %1066 = vmatpush1.msra.mxu0 0.0
  %1067 = vmatprep.subr.mxu0 0.0
  %1068 = vmatpush1.msra.mxu0 0.0
  %1069 = vmatprep.subr.mxu0 0.0
  %1070 = vmatpush1.msra.mxu0 0.0
  %1071 = vmatprep.subr.mxu0 0.0
  %1072 = vmatpush1.msra.mxu0 0.0
  %1073 = vmatprep.subr.mxu0 0.0
  %1074 = vmatpush1.msra.mxu0 0.0
  %1075 = vmatprep.subr.mxu0 0.0
  %1076 = vmatpush1.msra.mxu0 0.0
  %1077 = vmatprep.subr.mxu0 0.0
  %1078 = vmatpush1.msra.mxu0 0.0
  %1079 = vmatprep.subr.mxu0 0.0
  %1080 = vmatpush1.msra.mxu0 0.0
  %1081 = vmatprep.subr.mxu0 0.0
  %1082 = vmatpush1.msra.mxu0 0.0
  %1083 = vmatprep.subr.mxu0 0.0
  %1084 = vmatpush1.msra.mxu0 0.0
  %1085 = vmatprep.subr.mxu0 0.0
  %1086 = vmatpush1.msra.mxu0 0.0
  %1087 = vmatprep.subr.mxu0 0.0
  %1088 = vmatpush1.msra.mxu0 0.0
  %1089 = vmatprep.subr.mxu0 0.0
  %1090 = vmatpush1.msra.mxu0 0.0
  %1091 = vmatprep.subr.mxu0 0.0
  %1092 = vmatpush1.msra.mxu0 0.0
  %1093 = vmatprep.subr.mxu0 0.0
  %1094 = vmatpush1.msra.mxu0 0.0
  %1095 = vmatprep.subr.mxu0 0.0
  %1096 = vmatpush1.msra.mxu0 0.0
  %1097 = vmatprep.subr.mxu0 0.0
  %1098 = vmatpush1.msra.mxu0 0.0
  %1099 = vmatprep.subr.mxu0 0.0
  %1100 = vmatpush1.msra.mxu0 0.0
  %1101 = vmatprep.subr.mxu0 0.0
  %1102 = vmatpush1.msra.mxu0 0.0
  %1103 = vmatprep.subr.mxu0 0.0
  %1104 = vmatpush1.msra.mxu0 0.0
  %1105 = vmatprep.subr.mxu0 0.0
  %1106 = vmatpush1.msra.mxu0 0.0
  %1107 = vmatprep.subr.mxu0 0.0
  %1108 = vmatpush1.msra.mxu0 0.0
  %1109 = vmatprep.subr.mxu0 0.0
  %1110 = vmatpush1.msra.mxu0 0.0
  %1111 = vmatprep.subr.mxu0 0.0
  %1112 = vmatpush1.msra.mxu0 0.0
  %1113 = vmatprep.subr.mxu0 0.0
  %1114 = vmatpush1.msra.mxu0 0.0
  %1115 = vmatprep.subr.mxu0 0.0
  %1116 = vmatpush1.msra.mxu0 0.0
  %1117 = vmatprep.subr.mxu0 0.0
  %1118 = vmatpush1.msra.mxu0 0.0
  %1119 = vmatprep.subr.mxu0 0.0
  %1120 = vmatpush1.msra.mxu0 0.0
  %1121 = vmatprep.subr.mxu0 0.0
  %1122 = vmatpush1.msra.mxu0 0.0
  %1123 = vmatprep.subr.mxu0 0.0
  %1124 = vmatpush1.msra.mxu0 0.0
  %1125 = vmatprep.mubr.f32.mxu0 0.0
  %1126 = vmatmul.mubr.f32.gmra.mrb[0].mxu0 %v71
  %v1127 = vpop.f32.mrb[0].mxu0
  %v1128 = vadd.f32 %v35, %v1127
  %v1129 = vpop.f32.mrb[0].mxu0
  %v1130 = vadd.f32 %v35, %v1129
  %1131 = vdwg.mxu0
  %1132 = vmatprep.subr.mxu0 %v132
  %1133 = vmatpush1.msra.mxu0 %v130
  %1134 = vmatprep.subr.mxu0 0.0
  %1135 = vmatpush1.msra.mxu0 0.0
  %1136 = vmatprep.subr.mxu0 0.0
  %1137 = vmatpush1.msra.mxu0 0.0
  %1138 = vmatprep.subr.mxu0 0.0
  %1139 = vmatpush1.msra.mxu0 0.0
  %1140 = vmatprep.subr.mxu0 0.0
  %1141 = vmatpush1.msra.mxu0 0.0
  %1142 = vmatprep.subr.mxu0 0.0
  %1143 = vmatpush1.msra.mxu0 0.0
  %1144 = vmatprep.subr.mxu0 0.0
  %1145 = vmatpush1.msra.mxu0 0.0
  %1146 = vmatprep.subr.mxu0 0.0
  %1147 = vmatpush1.msra.mxu0 0.0
  %1148 = vmatprep.subr.mxu0 0.0
  %1149 = vmatpush1.msra.mxu0 0.0
  %1150 = vmatprep.subr.mxu0 0.0
  %1151 = vmatpush1.msra.mxu0 0.0
  %1152 = vmatprep.subr.mxu0 0.0
  %1153 = vmatpush1.msra.mxu0 0.0
  %1154 = vmatprep.subr.mxu0 0.0
  %1155 = vmatpush1.msra.mxu0 0.0
  %1156 = vmatprep.subr.mxu0 0.0
  %1157 = vmatpush1.msra.mxu0 0.0
  %1158 = vmatprep.subr.mxu0 0.0
  %1159 = vmatpush1.msra.mxu0 0.0
  %1160 = vmatprep.subr.mxu0 0.0
  %1161 = vmatpush1.msra.mxu0 0.0
  %1162 = vmatprep.subr.mxu0 0.0
  %1163 = vmatpush1.msra.mxu0 0.0
  %1164 = vmatprep.subr.mxu0 0.0
  %1165 = vmatpush1.msra.mxu0 0.0
  %1166 = vmatprep.subr.mxu0 0.0
  %1167 = vmatpush1.msra.mxu0 0.0
  %1168 = vmatprep.subr.mxu0 0.0
  %1169 = vmatpush1.msra.mxu0 0.0
  %1170 = vmatprep.subr.mxu0 0.0
  %1171 = vmatpush1.msra.mxu0 0.0
  %1172 = vmatprep.subr.mxu0 0.0
  %1173 = vmatpush1.msra.mxu0 0.0
  %1174 = vmatprep.subr.mxu0 0.0
  %1175 = vmatpush1.msra.mxu0 0.0
  %1176 = vmatprep.subr.mxu0 0.0
  %1177 = vmatpush1.msra.mxu0 0.0
  %1178 = vmatprep.subr.mxu0 0.0
  %1179 = vmatpush1.msra.mxu0 0.0
  %1180 = vmatprep.subr.mxu0 0.0
  %1181 = vmatpush1.msra.mxu0 0.0
  %1182 = vmatprep.subr.mxu0 0.0
  %1183 = vmatpush1.msra.mxu0 0.0
  %1184 = vmatprep.subr.mxu0 0.0
  %1185 = vmatpush1.msra.mxu0 0.0
  %1186 = vmatprep.subr.mxu0 0.0
  %1187 = vmatpush1.msra.mxu0 0.0
  %1188 = vmatprep.subr.mxu0 0.0
  %1189 = vmatpush1.msra.mxu0 0.0
  %1190 = vmatprep.subr.mxu0 0.0
  %1191 = vmatpush1.msra.mxu0 0.0
  %1192 = vmatprep.subr.mxu0 0.0
  %1193 = vmatpush1.msra.mxu0 0.0
  %1194 = vmatprep.subr.mxu0 0.0
  %1195 = vmatpush1.msra.mxu0 0.0
  %1196 = vmatprep.mubr.f32.mxu0 0.0
  %1197 = vmatmul.mubr.f32.gmra.mrb[0].mxu0 %v71
  %v1198 = vpop.f32.mrb[0].mxu0
  %v1199 = vadd.f32 %v35, %v1198
  %v1200 = vpop.f32.mrb[0].mxu0
  %v1201 = vadd.f32 %v35, %v1200
  %1202 = vdwg.mxu0
  %1203 = vmatprep.subr.mxu0 %v136
  %1204 = vmatpush1.msra.mxu0 %v134
  %1205 = vmatprep.subr.mxu0 0.0
  %1206 = vmatpush1.msra.mxu0 0.0
  %1207 = vmatprep.subr.mxu0 0.0
  %1208 = vmatpush1.msra.mxu0 0.0
  %1209 = vmatprep.subr.mxu0 0.0
  %1210 = vmatpush1.msra.mxu0 0.0
  %1211 = vmatprep.subr.mxu0 0.0
  %1212 = vmatpush1.msra.mxu0 0.0
  %1213 = vmatprep.subr.mxu0 0.0
  %1214 = vmatpush1.msra.mxu0 0.0
  %1215 = vmatprep.subr.mxu0 0.0
  %1216 = vmatpush1.msra.mxu0 0.0
  %1217 = vmatprep.subr.mxu0 0.0
  %1218 = vmatpush1.msra.mxu0 0.0
  %1219 = vmatprep.subr.mxu0 0.0
  %1220 = vmatpush1.msra.mxu0 0.0
  %1221 = vmatprep.subr.mxu0 0.0
  %1222 = vmatpush1.msra.mxu0 0.0
  %1223 = vmatprep.subr.mxu0 0.0
  %1224 = vmatpush1.msra.mxu0 0.0
  %1225 = vmatprep.subr.mxu0 0.0
  %1226 = vmatpush1.msra.mxu0 0.0
  %1227 = vmatprep.subr.mxu0 0.0
  %1228 = vmatpush1.msra.mxu0 0.0
  %1229 = vmatprep.subr.mxu0 0.0
  %1230 = vmatpush1.msra.mxu0 0.0
  %1231 = vmatprep.subr.mxu0 0.0
  %1232 = vmatpush1.msra.mxu0 0.0
  %1233 = vmatprep.subr.mxu0 0.0
  %1234 = vmatpush1.msra.mxu0 0.0
  %1235 = vmatprep.subr.mxu0 0.0
  %1236 = vmatpush1.msra.mxu0 0.0
  %1237 = vmatprep.subr.mxu0 0.0
  %1238 = vmatpush1.msra.mxu0 0.0
  %1239 = vmatprep.subr.mxu0 0.0
  %1240 = vmatpush1.msra.mxu0 0.0
  %1241 = vmatprep.subr.mxu0 0.0
  %1242 = vmatpush1.msra.mxu0 0.0
  %1243 = vmatprep.subr.mxu0 0.0
  %1244 = vmatpush1.msra.mxu0 0.0
  %1245 = vmatprep.subr.mxu0 0.0
  %1246 = vmatpush1.msra.mxu0 0.0
  %1247 = vmatprep.subr.mxu0 0.0
  %1248 = vmatpush1.msra.mxu0 0.0
  %1249 = vmatprep.subr.mxu0 0.0
  %1250 = vmatpush1.msra.mxu0 0.0
  %1251 = vmatprep.subr.mxu0 0.0
  %1252 = vmatpush1.msra.mxu0 0.0
  %1253 = vmatprep.subr.mxu0 0.0
  %1254 = vmatpush1.msra.mxu0 0.0
  %1255 = vmatprep.subr.mxu0 0.0
  %1256 = vmatpush1.msra.mxu0 0.0
  %1257 = vmatprep.subr.mxu0 0.0
  %1258 = vmatpush1.msra.mxu0 0.0
  %1259 = vmatprep.subr.mxu0 0.0
  %1260 = vmatpush1.msra.mxu0 0.0
  %1261 = vmatprep.subr.mxu0 0.0
  %1262 = vmatpush1.msra.mxu0 0.0
  %1263 = vmatprep.subr.mxu0 0.0
  %1264 = vmatpush1.msra.mxu0 0.0
  %1265 = vmatprep.subr.mxu0 0.0
  %1266 = vmatpush1.msra.mxu0 0.0
  %1267 = vmatprep.mubr.f32.mxu0 0.0
  %1268 = vmatmul.mubr.f32.gmra.mrb[0].mxu0 %v71
  %v1269 = vpop.f32.mrb[0].mxu0
  %v1270 = vadd.f32 %v35, %v1269
  %v1271 = vpop.f32.mrb[0].mxu0
  %v1272 = vadd.f32 %v35, %v1271
  %1273 = vdwg.mxu0
  %v1274 = vmax.f32 %v205, 0.0
  %v1275 = vmax.f32 %v207, 0.0
  %v1276 = vmax.f32 %v276, 0.0
  %v1277 = vmax.f32 %v278, 0.0
  %v1278 = vmax.f32 %v347, 0.0
  %v1279 = vmax.f32 %v349, 0.0
  %v1280 = vmax.f32 %v418, 0.0
  %v1281 = vmax.f32 %v420, 0.0
  %v1282 = vmax.f32 %v489, 0.0
  %v1283 = vmax.f32 %v491, 0.0
  %v1284 = vmax.f32 %v560, 0.0
  %v1285 = vmax.f32 %v562, 0.0
  %v1286 = vmax.f32 %v631, 0.0
  %v1287 = vmax.f32 %v633, 0.0
  %v1288 = vmax.f32 %v702, 0.0
  %v1289 = vmax.f32 %v704, 0.0
  %v1290 = vmax.f32 %v773, 0.0
  %v1291 = vmax.f32 %v775, 0.0
  %v1292 = vmax.f32 %v844, 0.0
  %v1293 = vmax.f32 %v846, 0.0
  %v1294 = vmax.f32 %v915, 0.0
  %v1295 = vmax.f32 %v917, 0.0
  %v1296 = vmax.f32 %v986, 0.0
  %v1297 = vmax.f32 %v988, 0.0
  %v1298 = vmax.f32 %v1057, 0.0
  %v1299 = vmax.f32 %v1059, 0.0
  %v1300 = vmax.f32 %v1128, 0.0
  %v1301 = vmax.f32 %v1130, 0.0
  %v1302 = vmax.f32 %v1199, 0.0
  %v1303 = vmax.f32 %v1201, 0.0
  %v1304 = vmax.f32 %v1270, 0.0
  %v1305 = vmax.f32 %v1272, 0.0
  %1306 = vst [vmem:[%s3] sm:$0xff] %v1274
  %1307 = vst [vmem:[%s3 + $0x8] sm:$0xff] %v1275
  %1308 = vst [vmem:[%s3 + $0x10] sm:$0xff] %v1276
  %1309 = vst [vmem:[%s3 + $0x18] sm:$0xff] %v1277
  %1310 = vst [vmem:[%s3 + $0x20] sm:$0xff] %v1278
  %1311 = vst [vmem:[%s3 + $0x28] sm:$0xff] %v1279
  %1312 = vst [vmem:[%s3 + $0x30] sm:$0xff] %v1280
  %1313 = vst [vmem:[%s3 + $0x38] sm:$0xff] %v1281
  %1314 = vst [vmem:[%s3 + $0x40] sm:$0xff] %v1282
  %1315 = vst [vmem:[%s3 + $0x48] sm:$0xff] %v1283
  %1316 = vst [vmem:[%s3 + $0x50] sm:$0xff] %v1284
  %1317 = vst [vmem:[%s3 + $0x58] sm:$0xff] %v1285
  %1318 = vst [vmem:[%s3 + $0x60] sm:$0xff] %v1286
  %1319 = vst [vmem:[%s3 + $0x68] sm:$0xff] %v1287
  %1320 = vst [vmem:[%s3 + $0x70] sm:$0xff] %v1288
  %1321 = vst [vmem:[%s3 + $0x78] sm:$0xff] %v1289
  %1322 = vst [vmem:[%s3 + $0x80] sm:$0xff] %v1290
  %1323 = vst [vmem:[%s3 + $0x88] sm:$0xff] %v1291
  %1324 = vst [vmem:[%s3 + $0x90] sm:$0xff] %v1292
  %1325 = vst [vmem:[%s3 + $0x98] sm:$0xff] %v1293
  %1326 = vst [vmem:[%s3 + $0xa0] sm:$0xff] %v1294
  %1327 = vst [vmem:[%s3 + $0xa8] sm:$0xff] %v1295
  %1328 = vst [vmem:[%s3 + $0xb0] sm:$0xff] %v1296
  %1329 = vst [vmem:[%s3 + $0xb8] sm:$0xff] %v1297
  %1330 = vst [vmem:[%s3 + $0xc0] sm:$0xff] %v1298
  %1331 = vst [vmem:[%s3 + $0xc8] sm:$0xff] %v1299
  %1332 = vst [vmem:[%s3 + $0xd0] sm:$0xff] %v1300
  %1333 = vst [vmem:[%s3 + $0xd8] sm:$0xff] %v1301
  %1334 = vst [vmem:[%s3 + $0xe0] sm:$0xff] %v1302
  %1335 = vst [vmem:[%s3 + $0xe8] sm:$0xff] %v1303
  %1336 = vst [vmem:[%s3 + $0xf0] sm:$0xff] %v1304
  %1337 = vst [vmem:[%s3 + $0xf8] sm:$0xff] %v1305
  // Predicated region
  $region14: #{fused_model_forward.1} parent=0 // pred_check
    _
  $region15: #{fused_model_forward.1} parent=0 // pred_check_branch
    %1339 = sbr.rel (0) target = $region17
  $region16: #{fused_model_forward.1} parent=0 // pred_region
    _
  $region17: #{fused_model_forward.1} parent=0 // pred_fallthru
    _
  // Predicated region
  $region18: #{fused_model_forward.1} parent=0 // pred_check
    _
  $region19: #{fused_model_forward.1} parent=0 // pred_check_branch
    %1341 = sbr.rel (0) target = $region21
  $region20: #{fused_model_forward.1} parent=0 // pred_region
    _
  $region21: #{fused_model_forward.1} parent=0 // pred_fallthru
    _

</llo_original>
